<compile_context>
chip_gen: v6e
topology: v6e:2x2x1
jax: 0.10.0
libtpu: 0.0.40
codegen_flags: <defaults>
</compile_context>

<pallas_src>
import math
from functools import lru_cache

import numpy as np
import jax
import jax.numpy as jnp
from jax.experimental import pallas as pl
from jax.experimental.pallas import tpu as pltpu


@lru_cache(maxsize=None)
def transpose_permutation(n, k, d):
    """Python port of the PyTorch helper. Returns a tuple of ints."""
    perm = list(range(n))
    p = (k - 1) * d
    for i in range((n - p) // (p + 1) - 1, 0, -1):
        perm[p + i], perm[p + (p + 1) * i] = perm[p + (p + 1) * i], perm[p + i]
    return tuple(perm)


def _copy_kernel(x_ref, o_ref):
    # Identity permutation degenerates to a plain tiled copy.
    o_ref[...] = x_ref[...]


def _perm_kernel(x_ref, idx_ref, o_ref):
    x = x_ref[...]                                  # (rows_tile, Wf)
    idx = jnp.broadcast_to(idx_ref[...], x.shape)   # hoisted: once per grid step
    o_ref[...] = jnp.take_along_axis(x, idx, axis=-1, mode="promise_in_bounds")


def transpose_perm(x, kernel_size=1, dilation=1):
    """Pallas implementation of TransposePerm.forward: x[..., perm]."""
    orig_shape = x.shape
    W = orig_shape[-1]
    itemsize = jnp.dtype(x.dtype).itemsize
    perm = np.asarray(transpose_permutation(W, kernel_size, dilation), dtype=np.int32)
    identity = bool(np.array_equal(perm, np.arange(W)))

    R = x.size // W                       # number of length-W rows
    # Fold g rows into the lane axis so the minor dim is as lane-dense as
    # possible (128 lanes when W divides 128 and R allows it).
    g = math.gcd(R, max(1, 128 // W))
    Wf = g * W
    R2 = R // g
    xf = x.reshape(R2, Wf)                # free: contiguous row-major view

    # Row-tile sizing: ~1 MiB per block; safe on v5e/v6e/v7x scoped VMEM
    # defaults even with double-buffered input + output.
    target_bytes = 1 << 20
    rows_tile = max(8, (target_bytes // max(1, Wf * itemsize)) // 8 * 8)
    rows_tile = min(rows_tile, R2)
    # Keep a few grid steps when possible so v7x's two TCs can split the work.
    min_grid = 4
    if R2 >= min_grid * 8:
        cap = max(8, (((R2 + min_grid - 1) // min_grid) + 7) // 8 * 8)
        rows_tile = min(rows_tile, cap)
    rows_tile = max(1, rows_tile)

    grid = ((R2 + rows_tile - 1) // rows_tile,)
    in_data_spec = pl.BlockSpec((rows_tile, Wf), lambda i: (i, 0))
    out_data_spec = pl.BlockSpec((rows_tile, Wf), lambda i: (i, 0))
    cost = pl.CostEstimate(flops=0, transcendentals=0,
                           bytes_accessed=2 * x.size * itemsize)
    cparams = pltpu.CompilerParams(dimension_semantics=("parallel",))

    if identity:
        out = pl.pallas_call(
            _copy_kernel,
            out_shape=jax.ShapeDtypeStruct((R2, Wf), x.dtype),
            grid=grid,
            in_specs=[in_data_spec],
            out_specs=out_data_spec,
            compiler_params=cparams,
            cost_estimate=cost,
        )(xf)
    else:
        # Folded permutation: lane l of a folded row maps to (l//W)*W + perm[l%W].
        perm_wide = (np.arange(g, dtype=np.int32)[:, None] * W
                     + perm[None, :]).reshape(1, Wf)
        idx2d = jnp.asarray(perm_wide, dtype=jnp.int32)
        idx_spec = pl.BlockSpec((1, Wf), lambda i: (0, 0))
        out = pl.pallas_call(
            _perm_kernel,
            out_shape=jax.ShapeDtypeStruct((R2, Wf), x.dtype),
            grid=grid,
            in_specs=[in_data_spec, idx_spec],
            out_specs=out_data_spec,
            compiler_params=cparams,
            cost_estimate=cost,
        )(xf, idx2d)

    return out.reshape(orig_shape)


if __name__ == "__main__":
    kernel_size = 3
    dilation = 2

    key = jax.random.PRNGKey(0)
    x = jax.random.normal(key, (2, 4, 16, 16), dtype=jnp.float32)

    # Main case: non-trivial permutation (for W=16, k=3, d=2 it swaps cols 5/9).
    y = transpose_perm(x, kernel_size=kernel_size, dilation=dilation)
    y = jax.block_until_ready(y)
    perm_ref = jnp.asarray(transpose_permutation(x.shape[-1], kernel_size, dilation))
    y_ref = x[..., perm_ref]
    assert y.shape == y_ref.shape, (y.shape, y_ref.shape)
    assert jnp.array_equal(y, y_ref), "mismatch vs reference permutation"

    # Identity path (kernel_size=1) exercises the plain-copy kernel.
    y_id = jax.block_until_ready(transpose_perm(x, kernel_size=1, dilation=1))
    assert jnp.array_equal(y_id, x), "identity permutation mismatch"

    print("KERNEL_OK")
</pallas_src>

<mosaic_0001>
module attributes {stable_mosaic.version = 11 : i64} {
  func.func @_perm_kernel(%arg0: i32, %arg1: memref<16x128xf32, #tpu.memory_space<vmem>>, %arg2: memref<1x128xi32, #tpu.memory_space<vmem>>, %arg3: memref<16x128xf32, #tpu.memory_space<vmem>>) attributes {dimension_semantics = [#tpu.dimension_semantics<parallel>], iteration_bounds = array<i64: 1>, scalar_prefetch = 0 : i64, scratch_operands = 0 : i64, tpu.core_type = #tpu.core_type<tc>, window_params = [{transform_indices = @transform_0, window_bounds = array<i64: 16, 128>}, {pipeline_mode = #tpu.pipeline_mode<synchronous>, transform_indices = @transform_1, window_bounds = array<i64: 1, 128>}, {transform_indices = @transform_2, window_bounds = array<i64: 16, 128>}]} {
    %c0 = arith.constant 0 : index
    %c0_0 = arith.constant 0 : index
    %0 = vector.load %arg1[%c0, %c0_0] : memref<16x128xf32, #tpu.memory_space<vmem>>, vector<16x128xf32>
    %c0_1 = arith.constant 0 : index
    %c0_2 = arith.constant 0 : index
    %1 = vector.load %arg2[%c0_1, %c0_2] : memref<1x128xi32, #tpu.memory_space<vmem>>, vector<1x128xi32>
    %2 = vector.shape_cast %1 : vector<1x128xi32> to vector<1x128xi32>
    %3 = vector.broadcast %2 : vector<1x128xi32> to vector<16x128xi32>
    %4 = vector.shape_cast %3 : vector<16x128xi32> to vector<16x128x1xi32>
    %5 = vector.shape_cast %4 : vector<16x128x1xi32> to vector<16x128xi32>
    %6 = tpu.dynamic_gather %0[%5] in [1] : vector<16x128xf32>, vector<16x128xi32> -> vector<16x128xf32>
    %c0_3 = arith.constant 0 : index
    %c0_4 = arith.constant 0 : index
    %7 = vector.load %arg3[%c0_3, %c0_4] : memref<16x128xf32, #tpu.memory_space<vmem>>, vector<16x128xf32>
    tpu.vector_store %arg3[%c0_3, %c0_4], %6 {strides = array<i32>} : memref<16x128xf32, #tpu.memory_space<vmem>>, vector<16x128xf32>,
    return
  }
  func.func @transform_0(%arg0: i32) -> (i32, i32) {
    %c0_i32 = arith.constant 0 : i32
    %c0_i32_0 = arith.constant 0 : i32
    return %arg0, %c0_i32 : i32, i32
  }
  func.func @transform_1(%arg0: i32) -> (i32, i32) {
    %c0_i32 = arith.constant 0 : i32
    %c0_i32_0 = arith.constant 0 : i32
    %c0_i32_1 = arith.constant 0 : i32
    return %c0_i32, %c0_i32_0 : i32, i32
  }
  func.func @transform_2(%arg0: i32) -> (i32, i32) {
    %c0_i32 = arith.constant 0 : i32
    %c0_i32_0 = arith.constant 0 : i32
    return %arg0, %c0_i32 : i32, i32
  }
}

</mosaic_0001>

<llo_original>
// kernel: tpu_custom_call.1
$region0: #{tpu_custom_call.1}
  #allocation0 [shape = 'u32[]', space=smem, size = 0x4, offset = 0x4, fixed_abs, tag = 'smem constant byte address 0x4 - core index']
  #allocation1 [shape = 'u32[144,128]{1,0:T(1,128)}', space=vmem, size = 0x12000, scoped, tag = 'internal scratch']
  %s0 = inlined_call_operand.hbm [shape: f32[16,128], index: 0, kind: input, shape index: {}]
  %s1 = inlined_call_operand.vmem [shape: s32[1,128], index: 1, kind: input, shape index: {}]
  %s2 = inlined_call_operand.hbm [shape: f32[16,128], index: 2, kind: output, shape index: {}]
  %s3 = sld [smem:[#allocation0]]
  $region22: #{tpu_custom_call.1} parent=0
    _
  %s5 = ssub.s32 1, %s3
  %s6 = scalar_select 0, %s5, %s3
  $region1: #{tpu_custom_call.1} parent=0
    #allocation2 [shape = 'u8[8192]{0}', space=vmem, size = 0x2000, scoped, tag = 'input window, operand 0, single buffered']
    #allocation3 [shape = 's32[1]{0}', space=sflag, size = 0x4, scoped, tag = 'scoped memory for tpu_custom_call.1']
    #allocation4 [shape = 's32[1]{0}', space=sflag, size = 0x4, scoped, tag = 'scoped memory for tpu_custom_call.1']
    #allocation5 [shape = 'u8[8192]{0}', space=vmem, size = 0x2000, scoped, tag = 'output window, operand 0, single buffered']
    %7 = vsyncpa [#allocation3], 0
    %8 = vsyncpa [#allocation4], 0
    // Predicated region
    $region2: #{tpu_custom_call.1} parent=1 // pred_check
      _
    $region3: #{tpu_custom_call.1} parent=1 // pred_check_branch
      %10 = sbr.rel (0) target = $region5
    $region4: #{tpu_custom_call.1} parent=1 // pred_region
      %s12 = ssub.s32 256, 256
      %13 = vsyncadd [#allocation3], %s12
      %s14 = sshll.u32 [#allocation2], 4
      %s15 = int_to_ptr.vmem [resolvable:$true] %s14
      %20 = dma.hbm_to_vmem [thread:$0]  %s0, 256, %s15, [#allocation3], 128, 128, 8
    $region5: #{tpu_custom_call.1} parent=1 // pred_fallthru
      _
    // Predicated region
    $region6: #{tpu_custom_call.1} parent=1 // pred_check
      _
    $region7: #{tpu_custom_call.1} parent=1 // pred_check_branch
      %22 = sbr.rel (0) target = $region9
    $region8: #{tpu_custom_call.1} parent=1 // pred_region
      _
    $region9: #{tpu_custom_call.1} parent=1 // pred_fallthru
      _
    // Predicated region
    $region10: #{tpu_custom_call.1} parent=1 // pred_check
      _
    $region11: #{tpu_custom_call.1} parent=1 // pred_check_branch
      %24 = sbr.rel (0) target = $region13
    $region12: #{tpu_custom_call.1} parent=1 // pred_region
      %25 = dma.done [#allocation3], 256
    $region13: #{tpu_custom_call.1} parent=1 // pred_fallthru
      _
    %v26 = vld [vmem:[#allocation2] sm:$0xff]
    %v27 = vld [vmem:[#allocation2 + $0x8] sm:$0xff]
    %v28 = vld [vmem:[%s1] sm:$0x1]
    %v29 = vlaneseq
    %v30 = vshrl.u32 %v29, 7
    %v31 = vsub.s32 0, %v30
    %v32 = vrot.slane %v28, %v31
    %33 = vset.pattern.permute.xlu0 %v32
    %34 = vperm.xlu0 %33, %v26
    %v35 = vpop.permute.xlu0 %34
    %36 = vset.pattern.permute.xlu0 %v32
    %37 = vperm.xlu0 %36, %v27
    %v38 = vpop.permute.xlu0 %37
    %39 = vst [vmem:[#allocation5] sm:$0xff] %v35
    %40 = vst [vmem:[#allocation5 + $0x8] sm:$0xff] %v38
    // Predicated region
    $region14: #{tpu_custom_call.1} parent=1 // pred_check
      _
    $region15: #{tpu_custom_call.1} parent=1 // pred_check_branch
      %42 = sbr.rel (0) target = $region17
    $region16: #{tpu_custom_call.1} parent=1 // pred_region
      %s44 = ssub.s32 256, 256
      %45 = vsyncadd [#allocation4], %s44
      %s46 = sshll.u32 [#allocation5], 4
      %s47 = int_to_ptr.vmem [resolvable:$true] %s46
      %52 = dma.vmem_to_hbm [thread:$0]  %s47, 256, %s2, [#allocation4], 128, 128, 8
    $region17: #{tpu_custom_call.1} parent=1 // pred_fallthru
      _
    // Predicated region
    $region18: #{tpu_custom_call.1} parent=1 // pred_check
      _
    $region19: #{tpu_custom_call.1} parent=1 // pred_check_branch
      %54 = sbr.rel (0) target = $region21
    $region20: #{tpu_custom_call.1} parent=1 // pred_region
      %55 = dma.done [#allocation4], 256
    $region21: #{tpu_custom_call.1} parent=1 // pred_fallthru
      _
    %56 = vsyncpa [#allocation3], 1
    %57 = vsyncpa [#allocation4], 1

</llo_original>
